<compile_context>
chip_gen: v7x
topology: tpu7x:2x2x1
jax: 0.10.0
libtpu: 0.0.40
codegen_flags: <defaults>
</compile_context>

<pallas_src>
import functools

import jax
import jax.numpy as jnp
from jax.experimental import pallas as pl
from jax.experimental.pallas import tpu as pltpu


def _translate_kernel(off_ref, dyq_ref, dxq_ref, ah_ref, aw_ref, img_ref,
                      out_ref, *, H, W):
    """One batch image per grid step.

    off_ref : (B, 2) f32 in SMEM  -- normalized (tx, ty) offsets.
    dyq_ref : (H, HW) f32         -- static row(in) - row(out pixel q) deltas.
    dxq_ref : (W, HW) f32         -- static col(in) - col(out pixel q) deltas.
    ah_ref  : (HW, H) f32         -- 0/1 row-membership expansion matrix.
    aw_ref  : (HW, W) f32         -- 0/1 col-membership expansion matrix.
    img_ref : (1, Cp, HW)         -- flattened image (lane-dense last dim).
    out_ref : (1, Cp, HW)
    """
    b = pl.program_id(0)

    # affine_grid + grid_sample (align_corners=False) pixel shifts:
    #   ix = j + tx * W / 2 ,  iy = i + ty * H / 2
    shift_x = off_ref[b, 0] * (W * 0.5)
    shift_y = off_ref[b, 1] * (H * 0.5)

    # Separable bilinear "tent" weights.  relu(1 - |delta - shift|) equals the
    # grid_sample bilinear weight for the two in-range neighbours and is
    # exactly 0 otherwise, which reproduces padding_mode='zeros' for free.
    # Only (H + W) * HW elements of VPU work instead of O(HW^2).
    wy_small = jnp.maximum(1.0 - jnp.abs(dyq_ref[...] - shift_y), 0.0)  # (H, HW)
    wx_small = jnp.maximum(1.0 - jnp.abs(dxq_ref[...] - shift_x), 0.0)  # (W, HW)

    # Expand to the full (HW_in, HW_out) interpolation matrix T = kron(Wy, Wx)
    # on the MXU: row p of wy_big is row (p // W) of wy_small, row p of wx_big
    # is row (p % W) of wx_small (the 0/1 matmuls replicate rows exactly).
    wy_big = jnp.dot(ah_ref[...], wy_small, preferred_element_type=jnp.float32)
    wx_big = jnp.dot(aw_ref[...], wx_small, preferred_element_type=jnp.float32)
    T = wy_big * wx_big                                    # (HW_in, HW_out)

    # NOTE: keep the image/T matmul in f32 -- a bf16 T breaks the ~2e-4
    # tolerance.  (MXU is nowhere near the bottleneck at these channel counts,
    # so the f32 multi-pass cost is irrelevant here.)
    img = img_ref[0].astype(jnp.float32)                   # (Cp, HW_in)
    out = jnp.dot(img, T, preferred_element_type=jnp.float32)
    out_ref[0] = out.astype(out_ref.dtype)


def _translate_real(imgs, offsets):
    """imgs: (B, C, H, W) real; offsets: (B, 2) normalized (tx, ty)."""
    B, C, H, W = imgs.shape
    HW = H * W
    if HW > 1024:
        # TODO(synk): for larger images, column-tile HW_out (second grid axis)
        # so the (HW, HW) interpolation matrix is never fully resident in VMEM.
        raise NotImplementedError(
            "flattened translation kernel supports H*W <= 1024")

    # Static separable index tables + 0/1 expansion matrices, hoisted out of
    # the kernel.  Total O(HW*(H+W)) bytes (a few KiB) instead of the old
    # O(HW^2) dk/dl tables; kept resident in VMEM via constant index_maps.
    q = jnp.arange(HW, dtype=jnp.int32)
    row_q = (q // W).astype(jnp.float32)                    # (HW,)
    col_q = (q % W).astype(jnp.float32)                     # (HW,)
    dyq = jnp.arange(H, dtype=jnp.float32)[:, None] - row_q[None, :]   # (H, HW)
    dxq = jnp.arange(W, dtype=jnp.float32)[:, None] - col_q[None, :]   # (W, HW)
    ah = (row_q[:, None] == jnp.arange(H, dtype=jnp.float32)[None, :]
          ).astype(jnp.float32)                             # (HW, H)
    aw = (col_q[:, None] == jnp.arange(W, dtype=jnp.float32)[None, :]
          ).astype(jnp.float32)                             # (HW, W)

    # Pad channels to a multiple of 8 sublanes -> full-vreg loads/stores and
    # full MXU row occupancy (complex path already arrives with 2C channels).
    Cp = ((C + 7) // 8) * 8
    imgs_flat = imgs.reshape(B, C, HW)
    if Cp != C:
        imgs_flat = jnp.pad(imgs_flat, ((0, 0), (0, Cp - C), (0, 0)))

    itemsize = int(jnp.dtype(imgs.dtype).itemsize)
    flops = B * (2 * Cp * HW * HW + 2 * (H + W) * HW * HW + 2 * HW * HW)
    bytes_accessed = (2 * B * Cp * HW * itemsize
                      + (3 * (H + W) * HW) * 4 + B * 2 * 4)
    vmem_need = (3 * HW * HW * 4                     # wy_big / wx_big / T temps
                 + 8 * (H + W) * HW * 4              # small static tables (x2 buf)
                 + 4 * Cp * HW * max(itemsize, 4)    # img/out blocks + f32 temps
                 + (2 << 20))                        # compiler scratch headroom
    vmem_limit = int(min(40 * 2**20, max(4 * 2**20, vmem_need)))

    kernel = functools.partial(_translate_kernel, H=H, W=W)
    out_flat = pl.pallas_call(
        kernel,
        out_shape=jax.ShapeDtypeStruct((B, Cp, HW), imgs.dtype),
        grid=(B,),
        in_specs=[
            pl.BlockSpec(memory_space=pltpu.MemorySpace.SMEM),  # offsets table
            pl.BlockSpec((H, HW), lambda b: (0, 0)),            # dyq (resident)
            pl.BlockSpec((W, HW), lambda b: (0, 0)),            # dxq (resident)
            pl.BlockSpec((HW, H), lambda b: (0, 0)),            # ah  (resident)
            pl.BlockSpec((HW, W), lambda b: (0, 0)),            # aw  (resident)
            pl.BlockSpec((1, Cp, HW), lambda b: (b, 0, 0)),     # one image/step
        ],
        out_specs=pl.BlockSpec((1, Cp, HW), lambda b: (b, 0, 0)),
        compiler_params=pltpu.CompilerParams(
            dimension_semantics=("parallel",),
            vmem_limit_bytes=vmem_limit,
        ),
        cost_estimate=pl.CostEstimate(
            flops=flops, transcendentals=0, bytes_accessed=bytes_accessed),
    )(offsets.astype(jnp.float32), dyq, dxq, ah, aw, imgs_flat)

    out_flat = out_flat[:, :C, :]
    return out_flat.reshape(B, C, H, W)


def translation_forward(imgs, offsets, jitter, key):
    """Equivalent of Translation.forward((imgs, offsets, jitter))."""
    noise = jnp.asarray(jitter, jnp.float32) * jax.random.normal(
        key, offsets.shape, dtype=jnp.float32)
    offs = offsets.astype(jnp.float32) + noise
    if jnp.iscomplexobj(imgs):
        # mirrors @complexify_function, but fused into ONE pallas_call by
        # stacking real/imag along the channel axis (2C = 8 sublanes for C=4).
        B, C, H, W = imgs.shape
        stacked = jnp.concatenate([jnp.real(imgs), jnp.imag(imgs)], axis=1)
        out = _translate_real(stacked, offs)
        return jax.lax.complex(out[:, :C], out[:, C:])
    return _translate_real(imgs, offs)


def _reference_translate(imgs, offsets):
    """Independent gather-based bilinear reference (matches grid_sample)."""
    B, C, H, W = imgs.shape
    outs = []
    for b in range(B):
        dx = offsets[b, 0] * (W * 0.5)
        dy = offsets[b, 1] * (H * 0.5)
        iy = jnp.arange(H, dtype=jnp.float32) + dy
        ix = jnp.arange(W, dtype=jnp.float32) + dx
        y0 = jnp.floor(iy)
        x0 = jnp.floor(ix)
        wy = (iy - y0)[None, :, None]
        wx = (ix - x0)[None, None, :]
        y0i = y0.astype(jnp.int32)
        x0i = x0.astype(jnp.int32)

        def gather(yi, xi):
            vy = ((yi >= 0) & (yi < H))[None, :, None]
            vx = ((xi >= 0) & (xi < W))[None, None, :]
            g = imgs[b][:, jnp.clip(yi, 0, H - 1), :][:, :, jnp.clip(xi, 0, W - 1)]
            return jnp.where(vy & vx, g, 0.0)

        v00 = gather(y0i, x0i)
        v01 = gather(y0i, x0i + 1)
        v10 = gather(y0i + 1, x0i)
        v11 = gather(y0i + 1, x0i + 1)
        o = ((1 - wy) * (1 - wx) * v00 + (1 - wy) * wx * v01
             + wy * (1 - wx) * v10 + wy * wx * v11)
        outs.append(o)
    return jnp.stack(outs, axis=0)


if __name__ == "__main__":
    key = jax.random.PRNGKey(0)
    k_img, k_off, k_noise = jax.random.split(key, 3)

    B, C, H, W = 2, 4, 16, 16
    imgs = jax.random.normal(k_img, (B, C, H, W), dtype=jnp.float32)
    offsets = 0.3 * jax.random.normal(k_off, (B, 2), dtype=jnp.float32)
    jitter = 0.05  # std of the jitter noise added to the offsets

    # Real path.
    out = translation_forward(imgs, offsets, jitter, k_noise)
    out = jax.block_until_ready(out)
    assert out.shape == imgs.shape and out.dtype == imgs.dtype

    # Recreate the exact jittered offsets used inside translation_forward and
    # compare against an independent gather-based bilinear reference.
    offs_j = offsets.astype(jnp.float32) + jnp.asarray(jitter, jnp.float32) * \
        jax.random.normal(k_noise, offsets.shape, dtype=jnp.float32)
    ref = _reference_translate(imgs, offs_j)
    err = float(jnp.max(jnp.abs(out - ref)))
    assert err < 2e-4, f"real path max abs error {err}"

    # Complex path (real/imag fused along channels into one pallas_call).
    imgs_imag = jnp.flip(imgs, axis=-1)
    cimgs = jax.lax.complex(imgs, imgs_imag)
    cout = jax.block_until_ready(translation_forward(cimgs, offsets, jitter, k_noise))
    cref = jax.lax.complex(_reference_translate(imgs, offs_j),
                           _reference_translate(imgs_imag, offs_j))
    cerr = float(jnp.max(jnp.abs(cout - cref)))
    assert cout.shape == cimgs.shape and cerr < 2e-4, f"complex path error {cerr}"

    print("KERNEL_OK")
</pallas_src>

<mosaic_0001>
module attributes {stable_mosaic.version = 11 : i64} {
  func.func @_translate_kernel(%arg0: i32, %arg1: memref<2x2xf32, #tpu.memory_space<smem>>, %arg2: memref<16x256xf32, #tpu.memory_space<vmem>>, %arg3: memref<16x256xf32, #tpu.memory_space<vmem>>, %arg4: memref<256x16xf32, #tpu.memory_space<vmem>>, %arg5: memref<256x16xf32, #tpu.memory_space<vmem>>, %arg6: memref<1x8x256xf32, #tpu.memory_space<vmem>>, %arg7: memref<1x8x256xf32, #tpu.memory_space<vmem>>) attributes {dimension_semantics = [#tpu.dimension_semantics<parallel>], iteration_bounds = array<i64: 2>, scalar_prefetch = 0 : i64, scratch_operands = 0 : i64, tpu.core_type = #tpu.core_type<tc>, window_params = [{transform_indices = @transform_0, window_bounds = array<i64: 2, 2>}, {pipeline_mode = #tpu.pipeline_mode<synchronous>, transform_indices = @transform_1, window_bounds = array<i64: 16, 256>}, {pipeline_mode = #tpu.pipeline_mode<synchronous>, transform_indices = @transform_2, window_bounds = array<i64: 16, 256>}, {pipeline_mode = #tpu.pipeline_mode<synchronous>, transform_indices = @transform_3, window_bounds = array<i64: 256, 16>}, {pipeline_mode = #tpu.pipeline_mode<synchronous>, transform_indices = @transform_4, window_bounds = array<i64: 256, 16>}, {transform_indices = @transform_5, window_bounds = array<i64: 1, 8, 256>}, {transform_indices = @transform_6, window_bounds = array<i64: 1, 8, 256>}]} {
    %0 = arith.index_cast %arg0 : i32 to index
    %c0 = arith.constant 0 : index
    %1 = memref.load %arg1[%0, %c0] : memref<2x2xf32, #tpu.memory_space<smem>>
    %cst = arith.constant 8.000000e+00 : f32
    %2 = arith.mulf %1, %cst : f32
    %3 = arith.index_cast %arg0 : i32 to index
    %c1 = arith.constant 1 : index
    %4 = memref.load %arg1[%3, %c1] : memref<2x2xf32, #tpu.memory_space<smem>>
    %cst_0 = arith.constant 8.000000e+00 : f32
    %5 = arith.mulf %4, %cst_0 : f32
    %c0_1 = arith.constant 0 : index
    %c0_2 = arith.constant 0 : index
    %6 = vector.load %arg2[%c0_1, %c0_2] : memref<16x256xf32, #tpu.memory_space<vmem>>, vector<16x256xf32>
    %7 = vector.broadcast %5 : f32 to vector<16x256xf32>
    %8 = arith.subf %6, %7 : vector<16x256xf32>
    %9 = math.absf %8 : vector<16x256xf32>
    %cst_3 = arith.constant 1.000000e+00 : f32
    %10 = vector.broadcast %cst_3 : f32 to vector<16x256xf32>
    %11 = arith.subf %10, %9 : vector<16x256xf32>
    %cst_4 = arith.constant 0.000000e+00 : f32
    %12 = vector.broadcast %cst_4 : f32 to vector<16x256xf32>
    %13 = arith.maximumf %11, %12 : vector<16x256xf32>
    %c0_5 = arith.constant 0 : index
    %c0_6 = arith.constant 0 : index
    %14 = vector.load %arg3[%c0_5, %c0_6] : memref<16x256xf32, #tpu.memory_space<vmem>>, vector<16x256xf32>
    %15 = vector.broadcast %2 : f32 to vector<16x256xf32>
    %16 = arith.subf %14, %15 : vector<16x256xf32>
    %17 = math.absf %16 : vector<16x256xf32>
    %cst_7 = arith.constant 1.000000e+00 : f32
    %18 = vector.broadcast %cst_7 : f32 to vector<16x256xf32>
    %19 = arith.subf %18, %17 : vector<16x256xf32>
    %cst_8 = arith.constant 0.000000e+00 : f32
    %20 = vector.broadcast %cst_8 : f32 to vector<16x256xf32>
    %21 = arith.maximumf %19, %20 : vector<16x256xf32>
    %c0_9 = arith.constant 0 : index
    %c0_10 = arith.constant 0 : index
    %22 = vector.load %arg4[%c0_9, %c0_10] : memref<256x16xf32, #tpu.memory_space<vmem>>, vector<256x16xf32>
    %cst_11 = arith.constant dense<0.000000e+00> : vector<256x256xf32>
    %23 = tpu.matmul %22, %13, %cst_11 {dimension_numbers = #tpu.dot_dimension_numbers<[1], [0], [0], [1], [0, 0, 1, 1], [], []>} : vector<256x16xf32>, vector<16x256xf32>, vector<256x256xf32> -> vector<256x256xf32>
    %c0_12 = arith.constant 0 : index
    %c0_13 = arith.constant 0 : index
    %24 = vector.load %arg5[%c0_12, %c0_13] : memref<256x16xf32, #tpu.memory_space<vmem>>, vector<256x16xf32>
    %cst_14 = arith.constant dense<0.000000e+00> : vector<256x256xf32>
    %25 = tpu.matmul %24, %21, %cst_14 {dimension_numbers = #tpu.dot_dimension_numbers<[1], [0], [0], [1], [0, 0, 1, 1], [], []>} : vector<256x16xf32>, vector<16x256xf32>, vector<256x256xf32> -> vector<256x256xf32>
    %26 = arith.mulf %23, %25 : vector<256x256xf32>
    %c0_15 = arith.constant 0 : index
    %c0_16 = arith.constant 0 : index
    %c0_17 = arith.constant 0 : index
    %27 = vector.load %arg6[%c0_15, %c0_16, %c0_17] : memref<1x8x256xf32, #tpu.memory_space<vmem>>, vector<1x8x256xf32>
    %28 = vector.shape_cast %27 : vector<1x8x256xf32> to vector<8x256xf32>
    %cst_18 = arith.constant dense<0.000000e+00> : vector<8x256xf32>
    %29 = tpu.matmul %28, %26, %cst_18 {dimension_numbers = #tpu.dot_dimension_numbers<[1], [0], [0], [1], [0, 0, 1, 1], [], []>} : vector<8x256xf32>, vector<256x256xf32>, vector<8x256xf32> -> vector<8x256xf32>
    %c0_19 = arith.constant 0 : index
    %c0_20 = arith.constant 0 : index
    %c0_21 = arith.constant 0 : index
    %30 = vector.load %arg7[%c0_19, %c0_20, %c0_21] : memref<1x8x256xf32, #tpu.memory_space<vmem>>, vector<1x8x256xf32>
    %31 = vector.shape_cast %30 : vector<1x8x256xf32> to vector<8x256xf32>
    %32 = vector.shape_cast %29 : vector<8x256xf32> to vector<1x8x256xf32>
    tpu.vector_store %arg7[%c0_19, %c0_20, %c0_21], %32 {strides = array<i32>} : memref<1x8x256xf32, #tpu.memory_space<vmem>>, vector<1x8x256xf32>,
    return
  }
  func.func @transform_0(%arg0: i32) -> (i32, i32) {
    %c0_i32 = arith.constant 0 : i32
    %c0_i32_0 = arith.constant 0 : i32
    %c0_i32_1 = arith.constant 0 : i32
    return %c0_i32, %c0_i32_0 : i32, i32
  }
  func.func @transform_1(%arg0: i32) -> (i32, i32) {
    %c0_i32 = arith.constant 0 : i32
    %c0_i32_0 = arith.constant 0 : i32
    %c0_i32_1 = arith.constant 0 : i32
    return %c0_i32, %c0_i32_0 : i32, i32
  }
  func.func @transform_2(%arg0: i32) -> (i32, i32) {
    %c0_i32 = arith.constant 0 : i32
    %c0_i32_0 = arith.constant 0 : i32
    %c0_i32_1 = arith.constant 0 : i32
    return %c0_i32, %c0_i32_0 : i32, i32
  }
  func.func @transform_3(%arg0: i32) -> (i32, i32) {
    %c0_i32 = arith.constant 0 : i32
    %c0_i32_0 = arith.constant 0 : i32
    %c0_i32_1 = arith.constant 0 : i32
    return %c0_i32, %c0_i32_0 : i32, i32
  }
  func.func @transform_4(%arg0: i32) -> (i32, i32) {
    %c0_i32 = arith.constant 0 : i32
    %c0_i32_0 = arith.constant 0 : i32
    %c0_i32_1 = arith.constant 0 : i32
    return %c0_i32, %c0_i32_0 : i32, i32
  }
  func.func @transform_5(%arg0: i32) -> (i32, i32, i32) {
    %c0_i32 = arith.constant 0 : i32
    %c0_i32_0 = arith.constant 0 : i32
    %c0_i32_1 = arith.constant 0 : i32
    return %arg0, %c0_i32, %c0_i32_0 : i32, i32, i32
  }
  func.func @transform_6(%arg0: i32) -> (i32, i32, i32) {
    %c0_i32 = arith.constant 0 : i32
    %c0_i32_0 = arith.constant 0 : i32
    %c0_i32_1 = arith.constant 0 : i32
    return %arg0, %c0_i32, %c0_i32_0 : i32, i32, i32
  }
}

</mosaic_0001>

<llo_original>
// kernel: tpu_custom_call.1
$region0: #{tpu_custom_call.1}
  #allocation0 [shape = 'u32[]', space=smem, size = 0x4, offset = 0x4, fixed_abs, tag = 'smem constant byte address 0x4 - core index']
  #allocation1 [shape = 'u32[144,128]{1,0:T(1,128)}', space=vmem, size = 0x12000, scoped, tag = 'internal scratch']
  %s0 = inlined_call_operand.vmem [shape: f32[2,2], index: 0, kind: input, shape index: {}]
  %s1 = inlined_call_operand.vmem [shape: f32[16,256], index: 1, kind: input, shape index: {}]
  %s2 = inlined_call_operand.vmem [shape: f32[16,256], index: 2, kind: input, shape index: {}]
  %s3 = inlined_call_operand.vmem [shape: f32[256,16], index: 3, kind: input, shape index: {}]
  %s4 = inlined_call_operand.vmem [shape: f32[256,16], index: 4, kind: input, shape index: {}]
  %s5 = inlined_call_operand.vmem [shape: f32[2,8,256], index: 5, kind: input, shape index: {}]
  %s6 = inlined_call_operand.hbm [shape: f32[2,8,256], index: 6, kind: output, shape index: {}]
  %s7 = sld [smem:[#allocation0]]
  $region61: #{tpu_custom_call.1} parent=0
    _
  %s9 = ssub.s32 1, %s7
  %s10 = scalar_select 0, %s9, %s7
  $region1: #{tpu_custom_call.1} parent=0
    #allocation2 [shape = 'u8[1024]{0}', space=smem, size = 0x400, scoped, tag = 'input window, operand 0, single buffered']
    #allocation3 [shape = 's32[2]{0}', space=sflag, size = 0x8, scoped, tag = 'scoped memory for tpu_custom_call.1']
    #allocation4 [shape = 's32[2]{0}', space=sflag, size = 0x8, scoped, tag = 'scoped memory for tpu_custom_call.1']
    #allocation5 [shape = 'u8[16384]{0}', space=vmem, size = 0x4000, scoped, tag = 'output window, operand 0']
    %11 = vsyncpa [#allocation4], 0
    %12 = vsyncpa [#allocation3], 0
    %s13 = scalar_lea.sflag [#allocation3], 1
    %14 = vsyncpa %s13, 0
    loop: start=0, step=1, limit=4
    $region2: #{tpu_custom_call.1} parent=1 // loop_pre_header
      _
    $region3: #{tpu_custom_call.1} parent=1 // loop_header
      %s16 = sphi 0, %s20
      %p17 = scmp.ge.s32.totalorder %s16, 4
      %s24 = sphi 0, %s24
      %s26 = sphi 0, %s24
      %s27 = sphi 0, %s26
      %s41 = sphi 0, %s27
      %s45 = sphi 0, %s45
      %s47 = sphi 0, %s45
      %s48 = sphi 0, %s47
      %s62 = sphi 0, %s48
      %s66 = sphi 0, %s66
      %s68 = sphi 0, %s66
      %s69 = sphi 0, %s68
      %s83 = sphi 0, %s69
      %s87 = sphi 0, %s87
      %s89 = sphi 0, %s87
      %s90 = sphi 0, %s89
      %s104 = sphi 0, %s90
      %s108 = sphi 0, %s108
      %s110 = sphi 0, %s108
      %s111 = sphi 0, %s110
      %s125 = sphi 0, %s111
      %s131 = sphi 0, %s133
      %s134 = sphi 0, %s131
      %s135 = sphi 0, %s134
      %s151 = sphi 0, %s135
      %s157 = sphi 0, %s159
      %s160 = sphi 0, %s157
      %s161 = sphi 0, %s160
      %s177 = sphi 0, %s161
    $region4: #{tpu_custom_call.1} parent=1 // loop_header_branch
      %19 = sbr.rel (%p17) target = $region8
    $region5: #{tpu_custom_call.1} parent=1 // loop_body
      %s21 = ssub.s32 %s16, 1
      %s22 = ssub.s32 %s16, 2
      %s23 = sadd.s32 %s16, 1
      %s25 = sadd.s32 %s24, 1
      %p28 = scmp.eq.s32.totalorder %s16, 1
      %p29 = scmp.ne.s32.totalorder %s24, %s26
      %p30 = scmp.eq.s32.totalorder %s16, 0
      %p31 = por %p29, %p30
      %p32 = scmp.ne.s32.totalorder %s24, %s26
      %p33 = scmp.eq.s32.totalorder %s21, 1
      %p34 = por %p32, %p33
      %p35 = scmp.ne.s32.totalorder %s26, %s27
      %p36 = scmp.eq.s32.totalorder %s21, 0
      %p37 = por %p35, %p36
      %p38 = scmp.ne.s32.totalorder %s26, %s27
      %p39 = scmp.eq.s32.totalorder %s22, 1
      %p40 = por %p38, %p39
      %p42 = scmp.ne.s32.totalorder %s27, %s41
      %p43 = scmp.eq.s32.totalorder %s22, 0
      %p44 = por %p42, %p43
      %s46 = sadd.s32 %s45, 1
      %p49 = scmp.eq.s32.totalorder %s16, 1
      %p50 = scmp.ne.s32.totalorder %s45, %s47
      %p51 = scmp.eq.s32.totalorder %s16, 0
      %p52 = por %p50, %p51
      %p53 = scmp.ne.s32.totalorder %s45, %s47
      %p54 = scmp.eq.s32.totalorder %s21, 1
      %p55 = por %p53, %p54
      %p56 = scmp.ne.s32.totalorder %s47, %s48
      %p57 = scmp.eq.s32.totalorder %s21, 0
      %p58 = por %p56, %p57
      %p59 = scmp.ne.s32.totalorder %s47, %s48
      %p60 = scmp.eq.s32.totalorder %s22, 1
      %p61 = por %p59, %p60
      %p63 = scmp.ne.s32.totalorder %s48, %s62
      %p64 = scmp.eq.s32.totalorder %s22, 0
      %p65 = por %p63, %p64
      %s67 = sadd.s32 %s66, 1
      %p70 = scmp.eq.s32.totalorder %s16, 1
      %p71 = scmp.ne.s32.totalorder %s66, %s68
      %p72 = scmp.eq.s32.totalorder %s16, 0
      %p73 = por %p71, %p72
      %p74 = scmp.ne.s32.totalorder %s66, %s68
      %p75 = scmp.eq.s32.totalorder %s21, 1
      %p76 = por %p74, %p75
      %p77 = scmp.ne.s32.totalorder %s68, %s69
      %p78 = scmp.eq.s32.totalorder %s21, 0
      %p79 = por %p77, %p78
      %p80 = scmp.ne.s32.totalorder %s68, %s69
      %p81 = scmp.eq.s32.totalorder %s22, 1
      %p82 = por %p80, %p81
      %p84 = scmp.ne.s32.totalorder %s69, %s83
      %p85 = scmp.eq.s32.totalorder %s22, 0
      %p86 = por %p84, %p85
      %s88 = sadd.s32 %s87, 1
      %p91 = scmp.eq.s32.totalorder %s16, 1
      %p92 = scmp.ne.s32.totalorder %s87, %s89
      %p93 = scmp.eq.s32.totalorder %s16, 0
      %p94 = por %p92, %p93
      %p95 = scmp.ne.s32.totalorder %s87, %s89
      %p96 = scmp.eq.s32.totalorder %s21, 1
      %p97 = por %p95, %p96
      %p98 = scmp.ne.s32.totalorder %s89, %s90
      %p99 = scmp.eq.s32.totalorder %s21, 0
      %p100 = por %p98, %p99
      %p101 = scmp.ne.s32.totalorder %s89, %s90
      %p102 = scmp.eq.s32.totalorder %s22, 1
      %p103 = por %p101, %p102
      %p105 = scmp.ne.s32.totalorder %s90, %s104
      %p106 = scmp.eq.s32.totalorder %s22, 0
      %p107 = por %p105, %p106
      %s109 = sadd.s32 %s108, 1
      %p112 = scmp.eq.s32.totalorder %s16, 1
      %p113 = scmp.ne.s32.totalorder %s108, %s110
      %p114 = scmp.eq.s32.totalorder %s16, 0
      %p115 = por %p113, %p114
      %p116 = scmp.ne.s32.totalorder %s108, %s110
      %p117 = scmp.eq.s32.totalorder %s21, 1
      %p118 = por %p116, %p117
      %p119 = scmp.ne.s32.totalorder %s110, %s111
      %p120 = scmp.eq.s32.totalorder %s21, 0
      %p121 = por %p119, %p120
      %p122 = scmp.ne.s32.totalorder %s110, %s111
      %p123 = scmp.eq.s32.totalorder %s22, 1
      %p124 = por %p122, %p123
      %p126 = scmp.ne.s32.totalorder %s111, %s125
      %p127 = scmp.eq.s32.totalorder %s22, 0
      %p128 = por %p126, %p127
      %s129 = ssub.s32 %s16, %s23
      %p130 = scmp.eq.s32.totalorder %s129, 0
      %s132 = sadd.s32 %s131, 1
      %s133 = scalar_select %p130, %s131, %s132
      %p136 = pneg %p130
      %p137 = scmp.eq.s32.totalorder %s16, 1
      %p138 = por %p136, %p137
      %p139 = scmp.ne.s32.totalorder %s131, %s134
      %p140 = scmp.eq.s32.totalorder %s16, 0
      %p141 = por %p139, %p140
      %p142 = scmp.ne.s32.totalorder %s131, %s134
      %p143 = scmp.eq.s32.totalorder %s21, 1
      %p144 = por %p142, %p143
      %p145 = scmp.ne.s32.totalorder %s134, %s135
      %p146 = scmp.eq.s32.totalorder %s21, 0
      %p147 = por %p145, %p146
      %p148 = scmp.ne.s32.totalorder %s134, %s135
      %p149 = scmp.eq.s32.totalorder %s22, 1
      %p150 = por %p148, %p149
      %p152 = scmp.ne.s32.totalorder %s135, %s151
      %p153 = scmp.eq.s32.totalorder %s22, 0
      %p154 = por %p152, %p153
      %s155 = ssub.s32 %s16, %s23
      %p156 = scmp.eq.s32.totalorder %s155, 0
      %s158 = sadd.s32 %s157, 1
      %s159 = scalar_select %p156, %s157, %s158
      %p162 = pneg %p156
      %p163 = scmp.eq.s32.totalorder %s16, 1
      %p164 = por %p162, %p163
      %p165 = scmp.ne.s32.totalorder %s157, %s160
      %p166 = scmp.eq.s32.totalorder %s16, 0
      %p167 = por %p165, %p166
      %p168 = scmp.ne.s32.totalorder %s157, %s160
      %p169 = scmp.eq.s32.totalorder %s21, 1
      %p170 = por %p168, %p169
      %p171 = scmp.ne.s32.totalorder %s160, %s161
      %p172 = scmp.eq.s32.totalorder %s21, 0
      %p173 = por %p171, %p172
      %p174 = scmp.ne.s32.totalorder %s160, %s161
      %p175 = scmp.eq.s32.totalorder %s22, 1
      %p176 = por %p174, %p175
      %p178 = scmp.ne.s32.totalorder %s161, %s177
      %p179 = scmp.eq.s32.totalorder %s22, 0
      %p180 = por %p178, %p179
      %p181 = scmp.le.s32.totalorder 1, %s16
      %p182 = scmp.lt.s32.totalorder %s16, 3
      %p183 = pnand %p181, %p182
      %p184 = pneg %p183
      // Predicated region
      $region9: #{tpu_custom_call.1} parent=5 // pred_check
        _
      $region10: #{tpu_custom_call.1} parent=5 // pred_check_branch
        %186 = sbr.rel (%p183) target = $region12
      $region11: #{tpu_custom_call.1} parent=5 // pred_region
        %s187 = ssub.s32 %s16, 1
        // Predicated region
        $region13: #{tpu_custom_call.1} parent=11 // pred_check
          %p188 = pneg %p37
        $region14: #{tpu_custom_call.1} parent=11 // pred_check_branch
          %190 = sbr.rel (%p188) target = $region16
        $region15: #{tpu_custom_call.1} parent=11 // pred_region
          %s192 = ssub.s32 32, 32
          %193 = vsyncadd [#allocation4], %s192
          %s195 = sshll.u32 %s0, 4
          %s196 = int_to_ptr.vmem [resolvable:$true] %s195
          %198 = dma.vmem_to_smem %s196, 32, [#allocation2], [#allocation4]
        $region16: #{tpu_custom_call.1} parent=11 // pred_fallthru
          _
        // Predicated region
        $region17: #{tpu_custom_call.1} parent=11 // pred_check
          %p199 = pneg %p58
        $region18: #{tpu_custom_call.1} parent=11 // pred_check_branch
          %201 = sbr.rel (%p199) target = $region20
        $region19: #{tpu_custom_call.1} parent=11 // pred_region
          _
        $region20: #{tpu_custom_call.1} parent=11 // pred_fallthru
          _
        // Predicated region
        $region21: #{tpu_custom_call.1} parent=11 // pred_check
          %p202 = pneg %p79
        $region22: #{tpu_custom_call.1} parent=11 // pred_check_branch
          %204 = sbr.rel (%p202) target = $region24
        $region23: #{tpu_custom_call.1} parent=11 // pred_region
          _
        $region24: #{tpu_custom_call.1} parent=11 // pred_fallthru
          _
        // Predicated region
        $region25: #{tpu_custom_call.1} parent=11 // pred_check
          %p205 = pneg %p100
        $region26: #{tpu_custom_call.1} parent=11 // pred_check_branch
          %207 = sbr.rel (%p205) target = $region28
        $region27: #{tpu_custom_call.1} parent=11 // pred_region
          _
        $region28: #{tpu_custom_call.1} parent=11 // pred_fallthru
          _
        // Predicated region
        $region29: #{tpu_custom_call.1} parent=11 // pred_check
          %p208 = pneg %p121
        $region30: #{tpu_custom_call.1} parent=11 // pred_check_branch
          %210 = sbr.rel (%p208) target = $region32
        $region31: #{tpu_custom_call.1} parent=11 // pred_region
          _
        $region32: #{tpu_custom_call.1} parent=11 // pred_fallthru
          _
      $region12: #{tpu_custom_call.1} parent=5 // pred_fallthru
        _
      %p211 = scmp.lt.s32.totalorder %s16, 2
      // Predicated region
      $region33: #{tpu_custom_call.1} parent=5 // pred_check
        %p212 = pneg %p211
      $region34: #{tpu_custom_call.1} parent=5 // pred_check_branch
        %214 = sbr.rel (%p212) target = $region36
      $region35: #{tpu_custom_call.1} parent=5 // pred_region
        // Predicated region
        $region37: #{tpu_custom_call.1} parent=35 // pred_check
          %p215 = pneg %p141
        $region38: #{tpu_custom_call.1} parent=35 // pred_check_branch
          %217 = sbr.rel (%p215) target = $region40
        $region39: #{tpu_custom_call.1} parent=35 // pred_region
          %p218 = scmp.lt.s32.totalorder %s16, 1
          %s219 = scalar_select %p218, %s16, 1
          %s220 = smul.addr %s219, 2
          %s221 = smul.addr %s220, 8
          %s222 = scalar_lea.vmem %s5, %s221
        $region40: #{tpu_custom_call.1} parent=35 // pred_fallthru
          _
      $region36: #{tpu_custom_call.1} parent=5 // pred_fallthru
        _
      %p223 = scmp.le.s32.totalorder 1, %s16
      %p224 = scmp.lt.s32.totalorder %s16, 3
      %p225 = pnand %p223, %p224
      %p226 = pneg %p225
      // Predicated region
      $region41: #{tpu_custom_call.1} parent=5 // pred_check
        _
      $region42: #{tpu_custom_call.1} parent=5 // pred_check_branch
        %228 = sbr.rel (%p225) target = $region44
      $region43: #{tpu_custom_call.1} parent=5 // pred_region
        %s229 = ssub.s32 %s16, 1
        // Predicated region
        $region45: #{tpu_custom_call.1} parent=43 // pred_check
          %p230 = pneg %p37
        $region46: #{tpu_custom_call.1} parent=43 // pred_check_branch
          %232 = sbr.rel (%p230) target = $region48
        $region47: #{tpu_custom_call.1} parent=43 // pred_region
          %233 = dma.done [#allocation4], 32
        $region48: #{tpu_custom_call.1} parent=43 // pred_fallthru
          _
        %234 = sfence
        %p235 = pneg %p37
        %p236 = pneg %p34
        %p237 = pneg %p58
        %p238 = pneg %p55
        %p239 = pneg %p79
        %p240 = pneg %p76
        %p241 = pneg %p100
        %p242 = pneg %p97
        %p243 = pneg %p121
        %p244 = pneg %p118
        %p245 = scmp.lt.s32.totalorder %s21, 1
        %s246 = scalar_select %p245, %s21, 1
        %s247 = smul.addr %s246, 2
        %s248 = smul.addr %s247, 8
        %s249 = scalar_lea.vmem %s5, %s248
        %p250 = pneg %p147
        %p251 = pneg %p144
        %p252 = pneg %p173
        %p253 = pneg %p170
        %s254 = sand.u32 %s160, 1
        %s255 = scalar_lea.sflag [#allocation3], %s254
        %s256 = sand.u32 %s160, 1
        %s257 = smul.addr %s256, 16
        %s258 = scalar_lea.vmem [#allocation5], %s257
        %p259 = scmp.lt.s32.totalorder %s21, 1
        %s260 = scalar_select %p259, %s21, 1
        %s261 = smul.addr %s260, 2
        %s262 = smul.addr %s261, 8
        %s263 = scalar_lea.vmem %s5, %s262
        %s264 = smul.u32 %s21, 128
        %s265 = sld [smem:[#allocation2 + %s264]]
        %s266 = smul.f32 %s265, 8.0
        %s267 = sadd.s32 %s264, 1
        %s268 = sld [smem:[#allocation2 + %s267]]
        %s269 = smul.f32 %s268, 8.0
        %v270 = vld [vmem:[%s1] sm:$0xff]
        %v271 = vld [vmem:[%s1 + $0x8] sm:$0xff]
        %v272 = vld [vmem:[%s1 + $0x10] sm:$0xff]
        %v273 = vld [vmem:[%s1 + $0x18] sm:$0xff]
        %v274 = vstv %s269
        %v275 = vsub.f32 %v270, %v274
        %v276 = vsub.f32 %v271, %v274
        %v277 = vsub.f32 %v272, %v274
        %v278 = vsub.f32 %v273, %v274
        %v279 = vand.u32 2147483647, %v275
        %v280 = vand.u32 2147483647, %v276
        %v281 = vand.u32 2147483647, %v277
        %v282 = vand.u32 2147483647, %v278
        %v283 = vsub.f32 1.0, %v279
        %v284 = vsub.f32 1.0, %v280
        %v285 = vsub.f32 1.0, %v281
        %v286 = vsub.f32 1.0, %v282
        %v287 = vmax.f32 %v283, 0.0
        %v288 = vmax.f32 %v284, 0.0
        %v289 = vmax.f32 %v285, 0.0
        %v290 = vmax.f32 %v286, 0.0
        %v291 = vld [vmem:[%s2] sm:$0xff]
        %v292 = vld [vmem:[%s2 + $0x8] sm:$0xff]
        %v293 = vld [vmem:[%s2 + $0x10] sm:$0xff]
        %v294 = vld [vmem:[%s2 + $0x18] sm:$0xff]
        %v295 = vstv %s266
        %v296 = vsub.f32 %v291, %v295
        %v297 = vsub.f32 %v292, %v295
        %v298 = vsub.f32 %v293, %v295
        %v299 = vsub.f32 %v294, %v295
        %v300 = vand.u32 2147483647, %v296
        %v301 = vand.u32 2147483647, %v297
        %v302 = vand.u32 2147483647, %v298
        %v303 = vand.u32 2147483647, %v299
        %v304 = vsub.f32 1.0, %v300
        %v305 = vsub.f32 1.0, %v301
        %v306 = vsub.f32 1.0, %v302
        %v307 = vsub.f32 1.0, %v303
        %v308 = vmax.f32 %v304, 0.0
        %v309 = vmax.f32 %v305, 0.0
        %v310 = vmax.f32 %v306, 0.0
        %v311 = vmax.f32 %v307, 0.0
        %v312 = vld [vmem:[%s3] sm:$0xff]
        %v313 = vld [vmem:[%s3 + $0x8] sm:$0xff]
        %v314 = vld [vmem:[%s3 + $0x10] sm:$0xff]
        %v315 = vld [vmem:[%s3 + $0x18] sm:$0xff]
        %v316 = vld [vmem:[%s3 + $0x20] sm:$0xff]
        %v317 = vld [vmem:[%s3 + $0x28] sm:$0xff]
        %v318 = vld [vmem:[%s3 + $0x30] sm:$0xff]
        %v319 = vld [vmem:[%s3 + $0x38] sm:$0xff]
        %v320 = vld [vmem:[%s3 + $0x40] sm:$0xff]
        %v321 = vld [vmem:[%s3 + $0x48] sm:$0xff]
        %v322 = vld [vmem:[%s3 + $0x50] sm:$0xff]
        %v323 = vld [vmem:[%s3 + $0x58] sm:$0xff]
        %v324 = vld [vmem:[%s3 + $0x60] sm:$0xff]
        %v325 = vld [vmem:[%s3 + $0x68] sm:$0xff]
        %v326 = vld [vmem:[%s3 + $0x70] sm:$0xff]
        %v327 = vld [vmem:[%s3 + $0x78] sm:$0xff]
        %v328 = vld [vmem:[%s3 + $0x80] sm:$0xff]
        %v329 = vld [vmem:[%s3 + $0x88] sm:$0xff]
        %v330 = vld [vmem:[%s3 + $0x90] sm:$0xff]
        %v331 = vld [vmem:[%s3 + $0x98] sm:$0xff]
        %v332 = vld [vmem:[%s3 + $0xa0] sm:$0xff]
        %v333 = vld [vmem:[%s3 + $0xa8] sm:$0xff]
        %v334 = vld [vmem:[%s3 + $0xb0] sm:$0xff]
        %v335 = vld [vmem:[%s3 + $0xb8] sm:$0xff]
        %v336 = vld [vmem:[%s3 + $0xc0] sm:$0xff]
        %v337 = vld [vmem:[%s3 + $0xc8] sm:$0xff]
        %v338 = vld [vmem:[%s3 + $0xd0] sm:$0xff]
        %v339 = vld [vmem:[%s3 + $0xd8] sm:$0xff]
        %v340 = vld [vmem:[%s3 + $0xe0] sm:$0xff]
        %v341 = vld [vmem:[%s3 + $0xe8] sm:$0xff]
        %v342 = vld [vmem:[%s3 + $0xf0] sm:$0xff]
        %v343 = vld [vmem:[%s3 + $0xf8] sm:$0xff]
        %vm344 = vcmask 130048
        %v346 = vsel %vm344, %v312, 0
        %v349 = vsel %vm344, %v313, 0
        %v352 = vsel %vm344, %v314, 0
        %v355 = vsel %vm344, %v315, 0
        %v358 = vsel %vm344, %v316, 0
        %v361 = vsel %vm344, %v317, 0
        %v364 = vsel %vm344, %v318, 0
        %v367 = vsel %vm344, %v319, 0
        %v370 = vsel %vm344, %v320, 0
        %v373 = vsel %vm344, %v321, 0
        %v376 = vsel %vm344, %v322, 0
        %v379 = vsel %vm344, %v323, 0
        %v382 = vsel %vm344, %v324, 0
        %v385 = vsel %vm344, %v325, 0
        %v388 = vsel %vm344, %v326, 0
        %v391 = vsel %vm344, %v327, 0
        %v394 = vsel %vm344, %v328, 0
        %v397 = vsel %vm344, %v329, 0
        %v400 = vsel %vm344, %v330, 0
        %v403 = vsel %vm344, %v331, 0
        %v406 = vsel %vm344, %v332, 0
        %v409 = vsel %vm344, %v333, 0
        %v412 = vsel %vm344, %v334, 0
        %v415 = vsel %vm344, %v335, 0
        %v418 = vsel %vm344, %v336, 0
        %v421 = vsel %vm344, %v337, 0
        %v424 = vsel %vm344, %v338, 0
        %v427 = vsel %vm344, %v339, 0
        %v430 = vsel %vm344, %v340, 0
        %v433 = vsel %vm344, %v341, 0
        %v436 = vsel %vm344, %v342, 0
        %v439 = vsel %vm344, %v343, 0
        %441 = vmatprep.subr.mxu0 %v288
        %442 = vmatpush1.msra.mxu0 %v287
        %443 = vmatprep.subr.mxu0 %v290
        %444 = vmatpush1.msra.mxu0 %v289
        %445 = vmatprep.subr.mxu0 0.0
        %446 = vmatpush1.msra.mxu0 0.0
        %447 = vmatprep.subr.mxu0 0.0
        %448 = vmatpush1.msra.mxu0 0.0
        %449 = vmatprep.subr.mxu0 0.0
        %450 = vmatpush1.msra.mxu0 0.0
        %451 = vmatprep.subr.mxu0 0.0
        %452 = vmatpush1.msra.mxu0 0.0
        %453 = vmatprep.subr.mxu0 0.0
        %454 = vmatpush1.msra.mxu0 0.0
        %455 = vmatprep.subr.mxu0 0.0
        %456 = vmatpush1.msra.mxu0 0.0
        %457 = vmatprep.subr.mxu0 0.0
        %458 = vmatpush1.msra.mxu0 0.0
        %459 = vmatprep.subr.mxu0 0.0
        %460 = vmatpush1.msra.mxu0 0.0
        %461 = vmatprep.subr.mxu0 0.0
        %462 = vmatpush1.msra.mxu0 0.0
        %463 = vmatprep.subr.mxu0 0.0
        %464 = vmatpush1.msra.mxu0 0.0
        %465 = vmatprep.subr.mxu0 0.0
        %466 = vmatpush1.msra.mxu0 0.0
        %467 = vmatprep.subr.mxu0 0.0
        %468 = vmatpush1.msra.mxu0 0.0
        %469 = vmatprep.subr.mxu0 0.0
        %470 = vmatpush1.msra.mxu0 0.0
        %471 = vmatprep.subr.mxu0 0.0
        %472 = vmatpush1.msra.mxu0 0.0
        %473 = vmatprep.subr.mxu0 0.0
        %474 = vmatpush1.msra.mxu0 0.0
        %475 = vmatprep.subr.mxu0 0.0
        %476 = vmatpush1.msra.mxu0 0.0
        %477 = vmatprep.subr.mxu0 0.0
        %478 = vmatpush1.msra.mxu0 0.0
        %479 = vmatprep.subr.mxu0 0.0
        %480 = vmatpush1.msra.mxu0 0.0
        %481 = vmatprep.subr.mxu0 0.0
        %482 = vmatpush1.msra.mxu0 0.0
        %483 = vmatprep.subr.mxu0 0.0
        %484 = vmatpush1.msra.mxu0 0.0
        %485 = vmatprep.subr.mxu0 0.0
        %486 = vmatpush1.msra.mxu0 0.0
        %487 = vmatprep.subr.mxu0 0.0
        %488 = vmatpush1.msra.mxu0 0.0
        %489 = vmatprep.subr.mxu0 0.0
        %490 = vmatpush1.msra.mxu0 0.0
        %491 = vmatprep.subr.mxu0 0.0
        %492 = vmatpush1.msra.mxu0 0.0
        %493 = vmatprep.subr.mxu0 0.0
        %494 = vmatpush1.msra.mxu0 0.0
        %495 = vmatprep.subr.mxu0 0.0
        %496 = vmatpush1.msra.mxu0 0.0
        %497 = vmatprep.subr.mxu0 0.0
        %498 = vmatpush1.msra.mxu0 0.0
        %499 = vmatprep.subr.mxu0 0.0
        %500 = vmatpush1.msra.mxu0 0.0
        %501 = vmatprep.subr.mxu0 0.0
        %502 = vmatpush1.msra.mxu0 0.0
        %503 = vmatprep.subr.mxu0 0.0
        %504 = vmatpush1.msra.mxu0 0.0
        %505 = vmatprep.mubr.f32.mxu0 0.0
        %506 = vmatmul.mubr.f32.gmra.mrb[0].mxu0 %v346
        %v507 = vpop.f32.mrb[0].mxu0
        %v508 = vadd.f32 0.0, %v507
        %v509 = vpop.f32.mrb[0].mxu0
        %v510 = vadd.f32 0.0, %v509
        %511 = vmatprep.mubr.f32.mxu0 0.0
        %512 = vmatmul.mubr.f32.gmra.mrb[0].mxu0 %v349
        %v513 = vpop.f32.mrb[0].mxu0
        %v514 = vadd.f32 0.0, %v513
        %v515 = vpop.f32.mrb[0].mxu0
        %v516 = vadd.f32 0.0, %v515
        %517 = vmatprep.mubr.f32.mxu0 0.0
        %518 = vmatmul.mubr.f32.gmra.mrb[0].mxu0 %v352
        %v519 = vpop.f32.mrb[0].mxu0
        %v520 = vadd.f32 0.0, %v519
        %v521 = vpop.f32.mrb[0].mxu0
        %v522 = vadd.f32 0.0, %v521
        %523 = vmatprep.mubr.f32.mxu0 0.0
        %524 = vmatmul.mubr.f32.gmra.mrb[0].mxu0 %v355
        %v525 = vpop.f32.mrb[0].mxu0
        %v526 = vadd.f32 0.0, %v525
        %v527 = vpop.f32.mrb[0].mxu0
        %v528 = vadd.f32 0.0, %v527
        %529 = vmatprep.mubr.f32.mxu0 0.0
        %530 = vmatmul.mubr.f32.gmra.mrb[0].mxu0 %v358
        %v531 = vpop.f32.mrb[0].mxu0
        %v532 = vadd.f32 0.0, %v531
        %v533 = vpop.f32.mrb[0].mxu0
        %v534 = vadd.f32 0.0, %v533
        %535 = vmatprep.mubr.f32.mxu0 0.0
        %536 = vmatmul.mubr.f32.gmra.mrb[0].mxu0 %v361
        %v537 = vpop.f32.mrb[0].mxu0
        %v538 = vadd.f32 0.0, %v537
        %v539 = vpop.f32.mrb[0].mxu0
        %v540 = vadd.f32 0.0, %v539
        %541 = vmatprep.mubr.f32.mxu0 0.0
        %542 = vmatmul.mubr.f32.gmra.mrb[0].mxu0 %v364
        %v543 = vpop.f32.mrb[0].mxu0
        %v544 = vadd.f32 0.0, %v543
        %v545 = vpop.f32.mrb[0].mxu0
        %v546 = vadd.f32 0.0, %v545
        %547 = vmatprep.mubr.f32.mxu0 0.0
        %548 = vmatmul.mubr.f32.gmra.mrb[0].mxu0 %v367
        %v549 = vpop.f32.mrb[0].mxu0
        %v550 = vadd.f32 0.0, %v549
        %v551 = vpop.f32.mrb[0].mxu0
        %v552 = vadd.f32 0.0, %v551
        %553 = vmatprep.mubr.f32.mxu0 0.0
        %554 = vmatmul.mubr.f32.gmra.mrb[0].mxu0 %v370
        %v555 = vpop.f32.mrb[0].mxu0
        %v556 = vadd.f32 0.0, %v555
        %v557 = vpop.f32.mrb[0].mxu0
        %v558 = vadd.f32 0.0, %v557
        %559 = vmatprep.mubr.f32.mxu0 0.0
        %560 = vmatmul.mubr.f32.gmra.mrb[0].mxu0 %v373
        %v561 = vpop.f32.mrb[0].mxu0
        %v562 = vadd.f32 0.0, %v561
        %v563 = vpop.f32.mrb[0].mxu0
        %v564 = vadd.f32 0.0, %v563
        %565 = vmatprep.mubr.f32.mxu0 0.0
        %566 = vmatmul.mubr.f32.gmra.mrb[0].mxu0 %v376
        %v567 = vpop.f32.mrb[0].mxu0
        %v568 = vadd.f32 0.0, %v567
        %v569 = vpop.f32.mrb[0].mxu0
        %v570 = vadd.f32 0.0, %v569
        %571 = vmatprep.mubr.f32.mxu0 0.0
        %572 = vmatmul.mubr.f32.gmra.mrb[0].mxu0 %v379
        %v573 = vpop.f32.mrb[0].mxu0
        %v574 = vadd.f32 0.0, %v573
        %v575 = vpop.f32.mrb[0].mxu0
        %v576 = vadd.f32 0.0, %v575
        %577 = vmatprep.mubr.f32.mxu0 0.0
        %578 = vmatmul.mubr.f32.gmra.mrb[0].mxu0 %v382
        %v579 = vpop.f32.mrb[0].mxu0
        %v580 = vadd.f32 0.0, %v579
        %v581 = vpop.f32.mrb[0].mxu0
        %v582 = vadd.f32 0.0, %v581
        %583 = vmatprep.mubr.f32.mxu0 0.0
        %584 = vmatmul.mubr.f32.gmra.mrb[0].mxu0 %v385
        %v585 = vpop.f32.mrb[0].mxu0
        %v586 = vadd.f32 0.0, %v585
        %v587 = vpop.f32.mrb[0].mxu0
        %v588 = vadd.f32 0.0, %v587
        %589 = vmatprep.mubr.f32.mxu0 0.0
        %590 = vmatmul.mubr.f32.gmra.mrb[0].mxu0 %v388
        %v591 = vpop.f32.mrb[0].mxu0
        %v592 = vadd.f32 0.0, %v591
        %v593 = vpop.f32.mrb[0].mxu0
        %v594 = vadd.f32 0.0, %v593
        %595 = vmatprep.mubr.f32.mxu0 0.0
        %596 = vmatmul.mubr.f32.gmra.mrb[0].mxu0 %v391
        %v597 = vpop.f32.mrb[0].mxu0
        %v598 = vadd.f32 0.0, %v597
        %v599 = vpop.f32.mrb[0].mxu0
        %v600 = vadd.f32 0.0, %v599
        %601 = vmatprep.mubr.f32.mxu0 0.0
        %602 = vmatmul.mubr.f32.gmra.mrb[0].mxu0 %v394
        %v603 = vpop.f32.mrb[0].mxu0
        %v604 = vadd.f32 0.0, %v603
        %v605 = vpop.f32.mrb[0].mxu0
        %v606 = vadd.f32 0.0, %v605
        %607 = vmatprep.mubr.f32.mxu0 0.0
        %608 = vmatmul.mubr.f32.gmra.mrb[0].mxu0 %v397
        %v609 = vpop.f32.mrb[0].mxu0
        %v610 = vadd.f32 0.0, %v609
        %v611 = vpop.f32.mrb[0].mxu0
        %v612 = vadd.f32 0.0, %v611
        %613 = vmatprep.mubr.f32.mxu0 0.0
        %614 = vmatmul.mubr.f32.gmra.mrb[0].mxu0 %v400
        %v615 = vpop.f32.mrb[0].mxu0
        %v616 = vadd.f32 0.0, %v615
        %v617 = vpop.f32.mrb[0].mxu0
        %v618 = vadd.f32 0.0, %v617
        %619 = vmatprep.mubr.f32.mxu0 0.0
        %620 = vmatmul.mubr.f32.gmra.mrb[0].mxu0 %v403
        %v621 = vpop.f32.mrb[0].mxu0
        %v622 = vadd.f32 0.0, %v621
        %v623 = vpop.f32.mrb[0].mxu0
        %v624 = vadd.f32 0.0, %v623
        %625 = vmatprep.mubr.f32.mxu0 0.0
        %626 = vmatmul.mubr.f32.gmra.mrb[0].mxu0 %v406
        %v627 = vpop.f32.mrb[0].mxu0
        %v628 = vadd.f32 0.0, %v627
        %v629 = vpop.f32.mrb[0].mxu0
        %v630 = vadd.f32 0.0, %v629
        %631 = vmatprep.mubr.f32.mxu0 0.0
        %632 = vmatmul.mubr.f32.gmra.mrb[0].mxu0 %v409
        %v633 = vpop.f32.mrb[0].mxu0
        %v634 = vadd.f32 0.0, %v633
        %v635 = vpop.f32.mrb[0].mxu0
        %v636 = vadd.f32 0.0, %v635
        %637 = vmatprep.mubr.f32.mxu0 0.0
        %638 = vmatmul.mubr.f32.gmra.mrb[0].mxu0 %v412
        %v639 = vpop.f32.mrb[0].mxu0
        %v640 = vadd.f32 0.0, %v639
        %v641 = vpop.f32.mrb[0].mxu0
        %v642 = vadd.f32 0.0, %v641
        %643 = vmatprep.mubr.f32.mxu0 0.0
        %644 = vmatmul.mubr.f32.gmra.mrb[0].mxu0 %v415
        %v645 = vpop.f32.mrb[0].mxu0
        %v646 = vadd.f32 0.0, %v645
        %v647 = vpop.f32.mrb[0].mxu0
        %v648 = vadd.f32 0.0, %v647
        %649 = vmatprep.mubr.f32.mxu0 0.0
        %650 = vmatmul.mubr.f32.gmra.mrb[0].mxu0 %v418
        %v651 = vpop.f32.mrb[0].mxu0
        %v652 = vadd.f32 0.0, %v651
        %v653 = vpop.f32.mrb[0].mxu0
        %v654 = vadd.f32 0.0, %v653
        %655 = vmatprep.mubr.f32.mxu0 0.0
        %656 = vmatmul.mubr.f32.gmra.mrb[0].mxu0 %v421
        %v657 = vpop.f32.mrb[0].mxu0
        %v658 = vadd.f32 0.0, %v657
        %v659 = vpop.f32.mrb[0].mxu0
        %v660 = vadd.f32 0.0, %v659
        %661 = vmatprep.mubr.f32.mxu0 0.0
        %662 = vmatmul.mubr.f32.gmra.mrb[0].mxu0 %v424
        %v663 = vpop.f32.mrb[0].mxu0
        %v664 = vadd.f32 0.0, %v663
        %v665 = vpop.f32.mrb[0].mxu0
        %v666 = vadd.f32 0.0, %v665
        %667 = vmatprep.mubr.f32.mxu0 0.0
        %668 = vmatmul.mubr.f32.gmra.mrb[0].mxu0 %v427
        %v669 = vpop.f32.mrb[0].mxu0
        %v670 = vadd.f32 0.0, %v669
        %v671 = vpop.f32.mrb[0].mxu0
        %v672 = vadd.f32 0.0, %v671
        %673 = vmatprep.mubr.f32.mxu0 0.0
        %674 = vmatmul.mubr.f32.gmra.mrb[0].mxu0 %v430
        %v675 = vpop.f32.mrb[0].mxu0
        %v676 = vadd.f32 0.0, %v675
        %v677 = vpop.f32.mrb[0].mxu0
        %v678 = vadd.f32 0.0, %v677
        %679 = vmatprep.mubr.f32.mxu0 0.0
        %680 = vmatmul.mubr.f32.gmra.mrb[0].mxu0 %v433
        %v681 = vpop.f32.mrb[0].mxu0
        %v682 = vadd.f32 0.0, %v681
        %v683 = vpop.f32.mrb[0].mxu0
        %v684 = vadd.f32 0.0, %v683
        %685 = vmatprep.mubr.f32.mxu0 0.0
        %686 = vmatmul.mubr.f32.gmra.mrb[0].mxu0 %v436
        %v687 = vpop.f32.mrb[0].mxu0
        %v688 = vadd.f32 0.0, %v687
        %v689 = vpop.f32.mrb[0].mxu0
        %v690 = vadd.f32 0.0, %v689
        %691 = vmatprep.mubr.f32.mxu0 0.0
        %692 = vmatmul.mubr.f32.gmra.mrb[0].mxu0 %v439
        %v693 = vpop.f32.mrb[0].mxu0
        %v694 = vadd.f32 0.0, %v693
        %v695 = vpop.f32.mrb[0].mxu0
        %v696 = vadd.f32 0.0, %v695
        %697 = vdwg.mxu0
        %v698 = vld [vmem:[%s4] sm:$0xff]
        %v699 = vld [vmem:[%s4 + $0x8] sm:$0xff]
        %v700 = vld [vmem:[%s4 + $0x10] sm:$0xff]
        %v701 = vld [vmem:[%s4 + $0x18] sm:$0xff]
        %v702 = vld [vmem:[%s4 + $0x20] sm:$0xff]
        %v703 = vld [vmem:[%s4 + $0x28] sm:$0xff]
        %v704 = vld [vmem:[%s4 + $0x30] sm:$0xff]
        %v705 = vld [vmem:[%s4 + $0x38] sm:$0xff]
        %v706 = vld [vmem:[%s4 + $0x40] sm:$0xff]
        %v707 = vld [vmem:[%s4 + $0x48] sm:$0xff]
        %v708 = vld [vmem:[%s4 + $0x50] sm:$0xff]
        %v709 = vld [vmem:[%s4 + $0x58] sm:$0xff]
        %v710 = vld [vmem:[%s4 + $0x60] sm:$0xff]
        %v711 = vld [vmem:[%s4 + $0x68] sm:$0xff]
        %v712 = vld [vmem:[%s4 + $0x70] sm:$0xff]
        %v713 = vld [vmem:[%s4 + $0x78] sm:$0xff]
        %v714 = vld [vmem:[%s4 + $0x80] sm:$0xff]
        %v715 = vld [vmem:[%s4 + $0x88] sm:$0xff]
        %v716 = vld [vmem:[%s4 + $0x90] sm:$0xff]
        %v717 = vld [vmem:[%s4 + $0x98] sm:$0xff]
        %v718 = vld [vmem:[%s4 + $0xa0] sm:$0xff]
        %v719 = vld [vmem:[%s4 + $0xa8] sm:$0xff]
        %v720 = vld [vmem:[%s4 + $0xb0] sm:$0xff]
        %v721 = vld [vmem:[%s4 + $0xb8] sm:$0xff]
        %v722 = vld [vmem:[%s4 + $0xc0] sm:$0xff]
        %v723 = vld [vmem:[%s4 + $0xc8] sm:$0xff]
        %v724 = vld [vmem:[%s4 + $0xd0] sm:$0xff]
        %v725 = vld [vmem:[%s4 + $0xd8] sm:$0xff]
        %v726 = vld [vmem:[%s4 + $0xe0] sm:$0xff]
        %v727 = vld [vmem:[%s4 + $0xe8] sm:$0xff]
        %v728 = vld [vmem:[%s4 + $0xf0] sm:$0xff]
        %v729 = vld [vmem:[%s4 + $0xf8] sm:$0xff]
        %v731 = vsel %vm344, %v698, 0
        %v734 = vsel %vm344, %v699, 0
        %v737 = vsel %vm344, %v700, 0
        %v740 = vsel %vm344, %v701, 0
        %v743 = vsel %vm344, %v702, 0
        %v746 = vsel %vm344, %v703, 0
        %v749 = vsel %vm344, %v704, 0
        %v752 = vsel %vm344, %v705, 0
        %v755 = vsel %vm344, %v706, 0
        %v758 = vsel %vm344, %v707, 0
        %v761 = vsel %vm344, %v708, 0
        %v764 = vsel %vm344, %v709, 0
        %v767 = vsel %vm344, %v710, 0
        %v770 = vsel %vm344, %v711, 0
        %v773 = vsel %vm344, %v712, 0
        %v776 = vsel %vm344, %v713, 0
        %v779 = vsel %vm344, %v714, 0
        %v782 = vsel %vm344, %v715, 0
        %v785 = vsel %vm344, %v716, 0
        %v788 = vsel %vm344, %v717, 0
        %v791 = vsel %vm344, %v718, 0
        %v794 = vsel %vm344, %v719, 0
        %v797 = vsel %vm344, %v720, 0
        %v800 = vsel %vm344, %v721, 0
        %v803 = vsel %vm344, %v722, 0
        %v806 = vsel %vm344, %v723, 0
        %v809 = vsel %vm344, %v724, 0
        %v812 = vsel %vm344, %v725, 0
        %v815 = vsel %vm344, %v726, 0
        %v818 = vsel %vm344, %v727, 0
        %v821 = vsel %vm344, %v728, 0
        %v824 = vsel %vm344, %v729, 0
        %826 = vmatprep.subr.mxu0 %v309
        %827 = vmatpush1.msra.mxu0 %v308
        %828 = vmatprep.subr.mxu0 %v311
        %829 = vmatpush1.msra.mxu0 %v310
        %830 = vmatprep.subr.mxu0 0.0
        %831 = vmatpush1.msra.mxu0 0.0
        %832 = vmatprep.subr.mxu0 0.0
        %833 = vmatpush1.msra.mxu0 0.0
        %834 = vmatprep.subr.mxu0 0.0
        %835 = vmatpush1.msra.mxu0 0.0
        %836 = vmatprep.subr.mxu0 0.0
        %837 = vmatpush1.msra.mxu0 0.0
        %838 = vmatprep.subr.mxu0 0.0
        %839 = vmatpush1.msra.mxu0 0.0
        %840 = vmatprep.subr.mxu0 0.0
        %841 = vmatpush1.msra.mxu0 0.0
        %842 = vmatprep.subr.mxu0 0.0
        %843 = vmatpush1.msra.mxu0 0.0
        %844 = vmatprep.subr.mxu0 0.0
        %845 = vmatpush1.msra.mxu0 0.0
        %846 = vmatprep.subr.mxu0 0.0
        %847 = vmatpush1.msra.mxu0 0.0
        %848 = vmatprep.subr.mxu0 0.0
        %849 = vmatpush1.msra.mxu0 0.0
        %850 = vmatprep.subr.mxu0 0.0
        %851 = vmatpush1.msra.mxu0 0.0
        %852 = vmatprep.subr.mxu0 0.0
        %853 = vmatpush1.msra.mxu0 0.0
        %854 = vmatprep.subr.mxu0 0.0
        %855 = vmatpush1.msra.mxu0 0.0
        %856 = vmatprep.subr.mxu0 0.0
        %857 = vmatpush1.msra.mxu0 0.0
        %858 = vmatprep.subr.mxu0 0.0
        %859 = vmatpush1.msra.mxu0 0.0
        %860 = vmatprep.subr.mxu0 0.0
        %861 = vmatpush1.msra.mxu0 0.0
        %862 = vmatprep.subr.mxu0 0.0
        %863 = vmatpush1.msra.mxu0 0.0
        %864 = vmatprep.subr.mxu0 0.0
        %865 = vmatpush1.msra.mxu0 0.0
        %866 = vmatprep.subr.mxu0 0.0
        %867 = vmatpush1.msra.mxu0 0.0
        %868 = vmatprep.subr.mxu0 0.0
        %869 = vmatpush1.msra.mxu0 0.0
        %870 = vmatprep.subr.mxu0 0.0
        %871 = vmatpush1.msra.mxu0 0.0
        %872 = vmatprep.subr.mxu0 0.0
        %873 = vmatpush1.msra.mxu0 0.0
        %874 = vmatprep.subr.mxu0 0.0
        %875 = vmatpush1.msra.mxu0 0.0
        %876 = vmatprep.subr.mxu0 0.0
        %877 = vmatpush1.msra.mxu0 0.0
        %878 = vmatprep.subr.mxu0 0.0
        %879 = vmatpush1.msra.mxu0 0.0
        %880 = vmatprep.subr.mxu0 0.0
        %881 = vmatpush1.msra.mxu0 0.0
        %882 = vmatprep.subr.mxu0 0.0
        %883 = vmatpush1.msra.mxu0 0.0
        %884 = vmatprep.subr.mxu0 0.0
        %885 = vmatpush1.msra.mxu0 0.0
        %886 = vmatprep.subr.mxu0 0.0
        %887 = vmatpush1.msra.mxu0 0.0
        %888 = vmatprep.subr.mxu0 0.0
        %889 = vmatpush1.msra.mxu0 0.0
        %890 = vmatprep.mubr.f32.mxu0 0.0
        %891 = vmatmul.mubr.f32.gmra.mrb[0].mxu0 %v731
        %v892 = vpop.f32.mrb[0].mxu0
        %v893 = vadd.f32 0.0, %v892
        %v894 = vpop.f32.mrb[0].mxu0
        %v895 = vadd.f32 0.0, %v894
        %896 = vmatprep.mubr.f32.mxu0 0.0
        %897 = vmatmul.mubr.f32.gmra.mrb[0].mxu0 %v734
        %v898 = vpop.f32.mrb[0].mxu0
        %v899 = vadd.f32 0.0, %v898
        %v900 = vpop.f32.mrb[0].mxu0
        %v901 = vadd.f32 0.0, %v900
        %902 = vmatprep.mubr.f32.mxu0 0.0
        %903 = vmatmul.mubr.f32.gmra.mrb[0].mxu0 %v737
        %v904 = vpop.f32.mrb[0].mxu0
        %v905 = vadd.f32 0.0, %v904
        %v906 = vpop.f32.mrb[0].mxu0
        %v907 = vadd.f32 0.0, %v906
        %908 = vmatprep.mubr.f32.mxu0 0.0
        %909 = vmatmul.mubr.f32.gmra.mrb[0].mxu0 %v740
        %v910 = vpop.f32.mrb[0].mxu0
        %v911 = vadd.f32 0.0, %v910
        %v912 = vpop.f32.mrb[0].mxu0
        %v913 = vadd.f32 0.0, %v912
        %914 = vmatprep.mubr.f32.mxu0 0.0
        %915 = vmatmul.mubr.f32.gmra.mrb[0].mxu0 %v743
        %v916 = vpop.f32.mrb[0].mxu0
        %v917 = vadd.f32 0.0, %v916
        %v918 = vpop.f32.mrb[0].mxu0
        %v919 = vadd.f32 0.0, %v918
        %920 = vmatprep.mubr.f32.mxu0 0.0
        %921 = vmatmul.mubr.f32.gmra.mrb[0].mxu0 %v746
        %v922 = vpop.f32.mrb[0].mxu0
        %v923 = vadd.f32 0.0, %v922
        %v924 = vpop.f32.mrb[0].mxu0
        %v925 = vadd.f32 0.0, %v924
        %926 = vmatprep.mubr.f32.mxu0 0.0
        %927 = vmatmul.mubr.f32.gmra.mrb[0].mxu0 %v749
        %v928 = vpop.f32.mrb[0].mxu0
        %v929 = vadd.f32 0.0, %v928
        %v930 = vpop.f32.mrb[0].mxu0
        %v931 = vadd.f32 0.0, %v930
        %932 = vmatprep.mubr.f32.mxu0 0.0
        %933 = vmatmul.mubr.f32.gmra.mrb[0].mxu0 %v752
        %v934 = vpop.f32.mrb[0].mxu0
        %v935 = vadd.f32 0.0, %v934
        %v936 = vpop.f32.mrb[0].mxu0
        %v937 = vadd.f32 0.0, %v936
        %938 = vmatprep.mubr.f32.mxu0 0.0
        %939 = vmatmul.mubr.f32.gmra.mrb[0].mxu0 %v755
        %v940 = vpop.f32.mrb[0].mxu0
        %v941 = vadd.f32 0.0, %v940
        %v942 = vpop.f32.mrb[0].mxu0
        %v943 = vadd.f32 0.0, %v942
        %944 = vmatprep.mubr.f32.mxu0 0.0
        %945 = vmatmul.mubr.f32.gmra.mrb[0].mxu0 %v758
        %v946 = vpop.f32.mrb[0].mxu0
        %v947 = vadd.f32 0.0, %v946
        %v948 = vpop.f32.mrb[0].mxu0
        %v949 = vadd.f32 0.0, %v948
        %950 = vmatprep.mubr.f32.mxu0 0.0
        %951 = vmatmul.mubr.f32.gmra.mrb[0].mxu0 %v761
        %v952 = vpop.f32.mrb[0].mxu0
        %v953 = vadd.f32 0.0, %v952
        %v954 = vpop.f32.mrb[0].mxu0
        %v955 = vadd.f32 0.0, %v954
        %956 = vmatprep.mubr.f32.mxu0 0.0
        %957 = vmatmul.mubr.f32.gmra.mrb[0].mxu0 %v764
        %v958 = vpop.f32.mrb[0].mxu0
        %v959 = vadd.f32 0.0, %v958
        %v960 = vpop.f32.mrb[0].mxu0
        %v961 = vadd.f32 0.0, %v960
        %962 = vmatprep.mubr.f32.mxu0 0.0
        %963 = vmatmul.mubr.f32.gmra.mrb[0].mxu0 %v767
        %v964 = vpop.f32.mrb[0].mxu0
        %v965 = vadd.f32 0.0, %v964
        %v966 = vpop.f32.mrb[0].mxu0
        %v967 = vadd.f32 0.0, %v966
        %968 = vmatprep.mubr.f32.mxu0 0.0
        %969 = vmatmul.mubr.f32.gmra.mrb[0].mxu0 %v770
        %v970 = vpop.f32.mrb[0].mxu0
        %v971 = vadd.f32 0.0, %v970
        %v972 = vpop.f32.mrb[0].mxu0
        %v973 = vadd.f32 0.0, %v972
        %974 = vmatprep.mubr.f32.mxu0 0.0
        %975 = vmatmul.mubr.f32.gmra.mrb[0].mxu0 %v773
        %v976 = vpop.f32.mrb[0].mxu0
        %v977 = vadd.f32 0.0, %v976
        %v978 = vpop.f32.mrb[0].mxu0
        %v979 = vadd.f32 0.0, %v978
        %980 = vmatprep.mubr.f32.mxu0 0.0
        %981 = vmatmul.mubr.f32.gmra.mrb[0].mxu0 %v776
        %v982 = vpop.f32.mrb[0].mxu0
        %v983 = vadd.f32 0.0, %v982
        %v984 = vpop.f32.mrb[0].mxu0
        %v985 = vadd.f32 0.0, %v984
        %986 = vmatprep.mubr.f32.mxu0 0.0
        %987 = vmatmul.mubr.f32.gmra.mrb[0].mxu0 %v779
        %v988 = vpop.f32.mrb[0].mxu0
        %v989 = vadd.f32 0.0, %v988
        %v990 = vpop.f32.mrb[0].mxu0
        %v991 = vadd.f32 0.0, %v990
        %992 = vmatprep.mubr.f32.mxu0 0.0
        %993 = vmatmul.mubr.f32.gmra.mrb[0].mxu0 %v782
        %v994 = vpop.f32.mrb[0].mxu0
        %v995 = vadd.f32 0.0, %v994
        %v996 = vpop.f32.mrb[0].mxu0
        %v997 = vadd.f32 0.0, %v996
        %998 = vmatprep.mubr.f32.mxu0 0.0
        %999 = vmatmul.mubr.f32.gmra.mrb[0].mxu0 %v785
        %v1000 = vpop.f32.mrb[0].mxu0
        %v1001 = vadd.f32 0.0, %v1000
        %v1002 = vpop.f32.mrb[0].mxu0
        %v1003 = vadd.f32 0.0, %v1002
        %1004 = vmatprep.mubr.f32.mxu0 0.0
        %1005 = vmatmul.mubr.f32.gmra.mrb[0].mxu0 %v788
        %v1006 = vpop.f32.mrb[0].mxu0
        %v1007 = vadd.f32 0.0, %v1006
        %v1008 = vpop.f32.mrb[0].mxu0
        %v1009 = vadd.f32 0.0, %v1008
        %1010 = vmatprep.mubr.f32.mxu0 0.0
        %1011 = vmatmul.mubr.f32.gmra.mrb[0].mxu0 %v791
        %v1012 = vpop.f32.mrb[0].mxu0
        %v1013 = vadd.f32 0.0, %v1012
        %v1014 = vpop.f32.mrb[0].mxu0
        %v1015 = vadd.f32 0.0, %v1014
        %1016 = vmatprep.mubr.f32.mxu0 0.0
        %1017 = vmatmul.mubr.f32.gmra.mrb[0].mxu0 %v794
        %v1018 = vpop.f32.mrb[0].mxu0
        %v1019 = vadd.f32 0.0, %v1018
        %v1020 = vpop.f32.mrb[0].mxu0
        %v1021 = vadd.f32 0.0, %v1020
        %1022 = vmatprep.mubr.f32.mxu0 0.0
        %1023 = vmatmul.mubr.f32.gmra.mrb[0].mxu0 %v797
        %v1024 = vpop.f32.mrb[0].mxu0
        %v1025 = vadd.f32 0.0, %v1024
        %v1026 = vpop.f32.mrb[0].mxu0
        %v1027 = vadd.f32 0.0, %v1026
        %1028 = vmatprep.mubr.f32.mxu0 0.0
        %1029 = vmatmul.mubr.f32.gmra.mrb[0].mxu0 %v800
        %v1030 = vpop.f32.mrb[0].mxu0
        %v1031 = vadd.f32 0.0, %v1030
        %v1032 = vpop.f32.mrb[0].mxu0
        %v1033 = vadd.f32 0.0, %v1032
        %1034 = vmatprep.mubr.f32.mxu0 0.0
        %1035 = vmatmul.mubr.f32.gmra.mrb[0].mxu0 %v803
        %v1036 = vpop.f32.mrb[0].mxu0
        %v1037 = vadd.f32 0.0, %v1036
        %v1038 = vpop.f32.mrb[0].mxu0
        %v1039 = vadd.f32 0.0, %v1038
        %1040 = vmatprep.mubr.f32.mxu0 0.0
        %1041 = vmatmul.mubr.f32.gmra.mrb[0].mxu0 %v806
        %v1042 = vpop.f32.mrb[0].mxu0
        %v1043 = vadd.f32 0.0, %v1042
        %v1044 = vpop.f32.mrb[0].mxu0
        %v1045 = vadd.f32 0.0, %v1044
        %1046 = vmatprep.mubr.f32.mxu0 0.0
        %1047 = vmatmul.mubr.f32.gmra.mrb[0].mxu0 %v809
        %v1048 = vpop.f32.mrb[0].mxu0
        %v1049 = vadd.f32 0.0, %v1048
        %v1050 = vpop.f32.mrb[0].mxu0
        %v1051 = vadd.f32 0.0, %v1050
        %1052 = vmatprep.mubr.f32.mxu0 0.0
        %1053 = vmatmul.mubr.f32.gmra.mrb[0].mxu0 %v812
        %v1054 = vpop.f32.mrb[0].mxu0
        %v1055 = vadd.f32 0.0, %v1054
        %v1056 = vpop.f32.mrb[0].mxu0
        %v1057 = vadd.f32 0.0, %v1056
        %1058 = vmatprep.mubr.f32.mxu0 0.0
        %1059 = vmatmul.mubr.f32.gmra.mrb[0].mxu0 %v815
        %v1060 = vpop.f32.mrb[0].mxu0
        %v1061 = vadd.f32 0.0, %v1060
        %v1062 = vpop.f32.mrb[0].mxu0
        %v1063 = vadd.f32 0.0, %v1062
        %1064 = vmatprep.mubr.f32.mxu0 0.0
        %1065 = vmatmul.mubr.f32.gmra.mrb[0].mxu0 %v818
        %v1066 = vpop.f32.mrb[0].mxu0
        %v1067 = vadd.f32 0.0, %v1066
        %v1068 = vpop.f32.mrb[0].mxu0
        %v1069 = vadd.f32 0.0, %v1068
        %1070 = vmatprep.mubr.f32.mxu0 0.0
        %1071 = vmatmul.mubr.f32.gmra.mrb[0].mxu0 %v821
        %v1072 = vpop.f32.mrb[0].mxu0
        %v1073 = vadd.f32 0.0, %v1072
        %v1074 = vpop.f32.mrb[0].mxu0
        %v1075 = vadd.f32 0.0, %v1074
        %1076 = vmatprep.mubr.f32.mxu0 0.0
        %1077 = vmatmul.mubr.f32.gmra.mrb[0].mxu0 %v824
        %v1078 = vpop.f32.mrb[0].mxu0
        %v1079 = vadd.f32 0.0, %v1078
        %v1080 = vpop.f32.mrb[0].mxu0
        %v1081 = vadd.f32 0.0, %v1080
        %1082 = vdwg.mxu0
        %v1083 = vmul.f32 %v508, %v893
        %v1084 = vmul.f32 %v510, %v895
        %v1085 = vmul.f32 %v514, %v899
        %v1086 = vmul.f32 %v516, %v901
        %v1087 = vmul.f32 %v520, %v905
        %v1088 = vmul.f32 %v522, %v907
        %v1089 = vmul.f32 %v526, %v911
        %v1090 = vmul.f32 %v528, %v913
        %v1091 = vmul.f32 %v532, %v917
        %v1092 = vmul.f32 %v534, %v919
        %v1093 = vmul.f32 %v538, %v923
        %v1094 = vmul.f32 %v540, %v925
        %v1095 = vmul.f32 %v544, %v929
        %v1096 = vmul.f32 %v546, %v931
        %v1097 = vmul.f32 %v550, %v935
        %v1098 = vmul.f32 %v552, %v937
        %v1099 = vmul.f32 %v556, %v941
        %v1100 = vmul.f32 %v558, %v943
        %v1101 = vmul.f32 %v562, %v947
        %v1102 = vmul.f32 %v564, %v949
        %v1103 = vmul.f32 %v568, %v953
        %v1104 = vmul.f32 %v570, %v955
        %v1105 = vmul.f32 %v574, %v959
        %v1106 = vmul.f32 %v576, %v961
        %v1107 = vmul.f32 %v580, %v965
        %v1108 = vmul.f32 %v582, %v967
        %v1109 = vmul.f32 %v586, %v971
        %v1110 = vmul.f32 %v588, %v973
        %v1111 = vmul.f32 %v592, %v977
        %v1112 = vmul.f32 %v594, %v979
        %v1113 = vmul.f32 %v598, %v983
        %v1114 = vmul.f32 %v600, %v985
        %v1115 = vmul.f32 %v604, %v989
        %v1116 = vmul.f32 %v606, %v991
        %v1117 = vmul.f32 %v610, %v995
        %v1118 = vmul.f32 %v612, %v997
        %v1119 = vmul.f32 %v616, %v1001
        %v1120 = vmul.f32 %v618, %v1003
        %v1121 = vmul.f32 %v622, %v1007
        %v1122 = vmul.f32 %v624, %v1009
        %v1123 = vmul.f32 %v628, %v1013
        %v1124 = vmul.f32 %v630, %v1015
        %v1125 = vmul.f32 %v634, %v1019
        %v1126 = vmul.f32 %v636, %v1021
        %v1127 = vmul.f32 %v640, %v1025
        %v1128 = vmul.f32 %v642, %v1027
        %v1129 = vmul.f32 %v646, %v1031
        %v1130 = vmul.f32 %v648, %v1033
        %v1131 = vmul.f32 %v652, %v1037
        %v1132 = vmul.f32 %v654, %v1039
        %v1133 = vmul.f32 %v658, %v1043
        %v1134 = vmul.f32 %v660, %v1045
        %v1135 = vmul.f32 %v664, %v1049
        %v1136 = vmul.f32 %v666, %v1051
        %v1137 = vmul.f32 %v670, %v1055
        %v1138 = vmul.f32 %v672, %v1057
        %v1139 = vmul.f32 %v676, %v1061
        %v1140 = vmul.f32 %v678, %v1063
        %v1141 = vmul.f32 %v682, %v1067
        %v1142 = vmul.f32 %v684, %v1069
        %v1143 = vmul.f32 %v688, %v1073
        %v1144 = vmul.f32 %v690, %v1075
        %v1145 = vmul.f32 %v694, %v1079
        %v1146 = vmul.f32 %v696, %v1081
        %v1147 = vld [vmem:[%s263] sm:$0xff]
        %v1148 = vld [vmem:[%s263 + $0x8] sm:$0xff]
        %1149 = vmatprep.subr.mxu0 %v1084
        %1150 = vmatpush1.msra.mxu0 %v1083
        %1151 = vmatprep.subr.mxu0 %v1086
        %1152 = vmatpush1.msra.mxu0 %v1085
        %1153 = vmatprep.subr.mxu0 %v1088
        %1154 = vmatpush1.msra.mxu0 %v1087
        %1155 = vmatprep.subr.mxu0 %v1090
        %1156 = vmatpush1.msra.mxu0 %v1089
        %1157 = vmatprep.subr.mxu0 %v1092
        %1158 = vmatpush1.msra.mxu0 %v1091
        %1159 = vmatprep.subr.mxu0 %v1094
        %1160 = vmatpush1.msra.mxu0 %v1093
        %1161 = vmatprep.subr.mxu0 %v1096
        %1162 = vmatpush1.msra.mxu0 %v1095
        %1163 = vmatprep.subr.mxu0 %v1098
        %1164 = vmatpush1.msra.mxu0 %v1097
        %1165 = vmatprep.subr.mxu0 %v1100
        %1166 = vmatpush1.msra.mxu0 %v1099
        %1167 = vmatprep.subr.mxu0 %v1102
        %1168 = vmatpush1.msra.mxu0 %v1101
        %1169 = vmatprep.subr.mxu0 %v1104
        %1170 = vmatpush1.msra.mxu0 %v1103
        %1171 = vmatprep.subr.mxu0 %v1106
        %1172 = vmatpush1.msra.mxu0 %v1105
        %1173 = vmatprep.subr.mxu0 %v1108
        %1174 = vmatpush1.msra.mxu0 %v1107
        %1175 = vmatprep.subr.mxu0 %v1110
        %1176 = vmatpush1.msra.mxu0 %v1109
        %1177 = vmatprep.subr.mxu0 %v1112
        %1178 = vmatpush1.msra.mxu0 %v1111
        %1179 = vmatprep.subr.mxu0 %v1114
        %1180 = vmatpush1.msra.mxu0 %v1113
        %1181 = vmatprep.subr.mxu0 %v1116
        %1182 = vmatpush1.msra.mxu0 %v1115
        %1183 = vmatprep.subr.mxu0 %v1118
        %1184 = vmatpush1.msra.mxu0 %v1117
        %1185 = vmatprep.subr.mxu0 %v1120
        %1186 = vmatpush1.msra.mxu0 %v1119
        %1187 = vmatprep.subr.mxu0 %v1122
        %1188 = vmatpush1.msra.mxu0 %v1121
        %1189 = vmatprep.subr.mxu0 %v1124
        %1190 = vmatpush1.msra.mxu0 %v1123
        %1191 = vmatprep.subr.mxu0 %v1126
        %1192 = vmatpush1.msra.mxu0 %v1125
        %1193 = vmatprep.subr.mxu0 %v1128
        %1194 = vmatpush1.msra.mxu0 %v1127
        %1195 = vmatprep.subr.mxu0 %v1130
        %1196 = vmatpush1.msra.mxu0 %v1129
        %1197 = vmatprep.subr.mxu0 %v1132
        %1198 = vmatpush1.msra.mxu0 %v1131
        %1199 = vmatprep.subr.mxu0 %v1134
        %1200 = vmatpush1.msra.mxu0 %v1133
        %1201 = vmatprep.subr.mxu0 %v1136
        %1202 = vmatpush1.msra.mxu0 %v1135
        %1203 = vmatprep.subr.mxu0 %v1138
        %1204 = vmatpush1.msra.mxu0 %v1137
        %1205 = vmatprep.subr.mxu0 %v1140
        %1206 = vmatpush1.msra.mxu0 %v1139
        %1207 = vmatprep.subr.mxu0 %v1142
        %1208 = vmatpush1.msra.mxu0 %v1141
        %1209 = vmatprep.subr.mxu0 %v1144
        %1210 = vmatpush1.msra.mxu0 %v1143
        %1211 = vmatprep.subr.mxu0 %v1146
        %1212 = vmatpush1.msra.mxu0 %v1145
        %1213 = vmatprep.mubr.f32.mxu0 %v1148
        %1214 = vmatmul.mubr.f32.gmra.mrb[0].mxu0 %v1147
        %v1215 = vpop.f32.mrb[0].mxu0
        %v1216 = vadd.f32 0.0, %v1215
        %v1217 = vpop.f32.mrb[0].mxu0
        %v1218 = vadd.f32 0.0, %v1217
        %1219 = vdwg.mxu0
        %1220 = vst [vmem:[%s258] sm:$0xff] %v1216
        %1221 = vst [vmem:[%s258 + $0x8] sm:$0xff] %v1218
        %s1222 = sand.u32 %s160, 1
        %s1223 = scalar_lea.sflag [#allocation3], %s1222
        %s1224 = sand.u32 %s160, 1
        %s1225 = smul.addr %s1224, 16
        %s1226 = scalar_lea.vmem [#allocation5], %s1225
        // Predicated region
        $region49: #{tpu_custom_call.1} parent=43 // pred_check
          %p1227 = pneg %p170
        $region50: #{tpu_custom_call.1} parent=43 // pred_check_branch
          %1229 = sbr.rel (%p1227) target = $region52
        $region51: #{tpu_custom_call.1} parent=43 // pred_region
          %s1231 = ssub.s32 256, 256
          %1232 = vsyncadd %s1223, %s1231
          %s1233 = smul.addr %s21, 2
          %s1234 = smul.addr %s1233, 128
          %s1235 = scalar_lea.hbm %s6, %s1234
          %s1237 = sshll.u32 %s1226, 4
          %s1238 = int_to_ptr.vmem [resolvable:$true] %s1237
          %1240 = dma.vmem_to_hbm [thread:$0]  %s1238, 256, %s1235, %s1223
        $region52: #{tpu_custom_call.1} parent=43 // pred_fallthru
          _
      $region44: #{tpu_custom_call.1} parent=5 // pred_fallthru
        _
      %p1241 = scmp.le.s32.totalorder 2, %s16
      // Predicated region
      $region53: #{tpu_custom_call.1} parent=5 // pred_check
        %p1242 = pneg %p1241
      $region54: #{tpu_custom_call.1} parent=5 // pred_check_branch
        %1244 = sbr.rel (%p1242) target = $region56
      $region55: #{tpu_custom_call.1} parent=5 // pred_region
        %s1245 = ssub.s32 %s16, 2
        // Predicated region
        $region57: #{tpu_custom_call.1} parent=55 // pred_check
          %p1246 = pneg %p176
        $region58: #{tpu_custom_call.1} parent=55 // pred_check_branch
          %1248 = sbr.rel (%p1246) target = $region60
        $region59: #{tpu_custom_call.1} parent=55 // pred_region
          %s1249 = sand.u32 %s161, 1
          %s1250 = scalar_lea.sflag [#allocation3], %s1249
          %s1251 = sand.u32 %s161, 1
          %s1252 = smul.addr %s1251, 16
          %s1253 = scalar_lea.vmem [#allocation5], %s1252
          %1254 = dma.done %s1250, 256
        $region60: #{tpu_custom_call.1} parent=55 // pred_fallthru
          _
      $region56: #{tpu_custom_call.1} parent=5 // pred_fallthru
        _
    $region6: #{tpu_custom_call.1} parent=1 // loop_footer
      %s20 = sadd.s32 1, %s16
    $region7: #{tpu_custom_call.1} parent=1 // loop_footer_branch
      %15 = sbr.rel target = $region3
    $region8: #{tpu_custom_call.1} parent=1 // loop_exit
      _
    %1255 = vsyncpa [#allocation3], 1
    %s1256 = scalar_lea.sflag [#allocation3], 1
    %1257 = vsyncpa %s1256, 1
    %1258 = vsyncpa [#allocation4], 1
    %s1259 = scalar_lea.sflag [#allocation4], 1
    %1260 = vsyncpa %s1259, 1

</llo_original>
